<compile_context>
chip_gen: v5e
topology: v5e:2x2
jax: 0.10.0
libtpu: 0.0.40
codegen_flags: <defaults>
</compile_context>

<pallas_src>
import jax
import jax.numpy as jnp
from jax.experimental import pallas as pl
from jax.experimental.pallas import tpu as pltpu

EPS = 1e-5  # norm_epsilon default


# --------------------------------------------------------------------------- #
# helpers
# --------------------------------------------------------------------------- #
def _round_up(x, m):
    return ((x + m - 1) // m) * m


def _row_tile(n_rows, tm):
    tm_eff = _round_up(min(tm, _round_up(n_rows, 8)), 8)
    n_pad = _round_up(n_rows, tm_eff)
    return tm_eff, n_pad


def _pad_rows(x2, n_pad):
    n = x2.shape[0]
    if n_pad != n:
        x2 = jnp.pad(x2, ((0, n_pad - n), (0, 0)))
    return x2


def _vmem_limit(tile_bytes):
    # headroom above the estimate, but never above what v7x can scope.
    return int(min(max(2 * tile_bytes, 32 << 20), 48 << 20))


# --------------------------------------------------------------------------- #
# kernels
# --------------------------------------------------------------------------- #
def _rms_mix(resid_f32, g_ref, wm_ref, bm_ref, out_h_ref):
    """RMSNorm (f32 stats) + linear mixer (bf16 MXU inputs, f32 accumulate)."""
    ms = jnp.mean(resid_f32 * resid_f32, axis=-1, keepdims=True)
    normed = resid_f32 * jax.lax.rsqrt(ms + EPS) * g_ref[...]
    y = jnp.dot(normed.astype(jnp.bfloat16), wm_ref[...],
                preferred_element_type=jnp.float32)
    out_h_ref[...] = (y + bm_ref[...]).astype(out_h_ref.dtype)


def block_kernel(h_ref, r_ref, g_ref, wm_ref, bm_ref, out_h_ref, out_r_ref):
    """Tile of rows: residual add + RMSNorm + linear mixer (residual given)."""
    resid = h_ref[...].astype(jnp.float32) + r_ref[...].astype(jnp.float32)
    out_r_ref[...] = resid.astype(out_r_ref.dtype)
    _rms_mix(resid, g_ref, wm_ref, bm_ref, out_h_ref)


def block_kernel_first(h_ref, g_ref, wm_ref, bm_ref, out_h_ref, out_r_ref):
    """First block: residual is None -> residual = hidden_states (no zeros DMA)."""
    resid = h_ref[...].astype(jnp.float32)
    out_r_ref[...] = resid.astype(out_r_ref.dtype)
    _rms_mix(resid, g_ref, wm_ref, bm_ref, out_h_ref)


def final_norm_kernel(h_ref, r_ref, g_ref, out_ref):
    """Final fused add + RMSNorm (prenorm=False)."""
    resid = h_ref[...].astype(jnp.float32) + r_ref[...].astype(jnp.float32)
    ms = jnp.mean(resid * resid, axis=-1, keepdims=True)
    out_ref[...] = (resid * jax.lax.rsqrt(ms + EPS) * g_ref[...]).astype(out_ref.dtype)


def final_norm_kernel_first(h_ref, g_ref, out_ref):
    resid = h_ref[...].astype(jnp.float32)
    ms = jnp.mean(resid * resid, axis=-1, keepdims=True)
    out_ref[...] = (resid * jax.lax.rsqrt(ms + EPS) * g_ref[...]).astype(out_ref.dtype)


def linear_kernel(x_ref, w_ref, b_ref, o_ref):
    """cond_affine: rows x (Cin -> D) matmul + bias (f32)."""
    y = jnp.dot(x_ref[...], w_ref[...], preferred_element_type=jnp.float32)
    o_ref[...] = (y + b_ref[...]).astype(o_ref.dtype)


# --------------------------------------------------------------------------- #
# pallas_call wrappers
# --------------------------------------------------------------------------- #
def block_forward(hidden, residual, block_params, *, tm=256):
    """Add -> RMSNorm -> Mixer.  hidden/residual: [B, S, D].
    Returns (mixer_out, residual_out_fp32)."""
    g2, wm_bf16, bm2 = block_params
    B, S, D = hidden.shape
    N = B * S
    tm_eff, n_pad = _row_tile(N, tm)
    h2 = _pad_rows(hidden.reshape(N, D), n_pad)

    row_spec = pl.BlockSpec((tm_eff, D), lambda i: (i, 0))
    vec_spec = pl.BlockSpec((1, D), lambda i: (0, 0))
    mat_spec = pl.BlockSpec((D, D), lambda i: (0, 0))

    if residual is None:
        kernel = block_kernel_first
        in_specs = [row_spec, vec_spec, mat_spec, vec_spec]
        args = (h2, g2, wm_bf16, bm2)
        n_row_streams = 3  # h read, out_h write, out_r write
    else:
        r2 = _pad_rows(residual.reshape(N, D).astype(jnp.float32), n_pad)
        kernel = block_kernel
        in_specs = [row_spec, row_spec, vec_spec, mat_spec, vec_spec]
        args = (h2, r2, g2, wm_bf16, bm2)
        n_row_streams = 4

    cost = pl.CostEstimate(
        flops=2 * n_pad * D * D,
        transcendentals=0,
        bytes_accessed=n_row_streams * n_pad * D * 4 + D * D * 2 + 3 * D * 4)
    vmem_est = 4 * 2 * tm_eff * D * 4 + 2 * D * D * 2 + 3 * D * 4

    out_h, out_r = pl.pallas_call(
        kernel,
        out_shape=(jax.ShapeDtypeStruct((n_pad, D), hidden.dtype),
                   jax.ShapeDtypeStruct((n_pad, D), jnp.float32)),  # residual_in_fp32
        grid_spec=pltpu.PrefetchScalarGridSpec(
            num_scalar_prefetch=0,
            grid=(n_pad // tm_eff,),
            in_specs=in_specs,
            out_specs=[row_spec, row_spec]),
        compiler_params=pltpu.CompilerParams(
            dimension_semantics=("parallel",),
            vmem_limit_bytes=_vmem_limit(vmem_est)),
        cost_estimate=cost,
    )(*args)

    if n_pad != N:
        out_h, out_r = out_h[:N], out_r[:N]
    return out_h.reshape(B, S, D), out_r.reshape(B, S, D)


def final_add_norm(hidden, residual, g2, *, tm=256):
    """Final fused add + RMSNorm, prenorm=False."""
    B, S, D = hidden.shape
    N = B * S
    tm_eff, n_pad = _row_tile(N, tm)
    h2 = _pad_rows(hidden.reshape(N, D), n_pad)

    row_spec = pl.BlockSpec((tm_eff, D), lambda i: (i, 0))
    vec_spec = pl.BlockSpec((1, D), lambda i: (0, 0))

    if residual is None:
        kernel = final_norm_kernel_first
        in_specs = [row_spec, vec_spec]
        args = (h2, g2)
    else:
        r2 = _pad_rows(residual.reshape(N, D).astype(jnp.float32), n_pad)
        kernel = final_norm_kernel
        in_specs = [row_spec, row_spec, vec_spec]
        args = (h2, r2, g2)

    out = pl.pallas_call(
        kernel,
        out_shape=jax.ShapeDtypeStruct((n_pad, D), hidden.dtype),
        grid_spec=pltpu.PrefetchScalarGridSpec(
            num_scalar_prefetch=0,
            grid=(n_pad // tm_eff,),
            in_specs=in_specs,
            out_specs=row_spec),
        compiler_params=pltpu.CompilerParams(
            dimension_semantics=("parallel",),
            vmem_limit_bytes=_vmem_limit(3 * 2 * tm_eff * D * 4)),
    )(*args)

    if n_pad != N:
        out = out[:N]
    return out.reshape(B, S, D)


def linear_forward(x, w_t, b2, *, tm=256):
    """cond_affine: x [B, L, Cin] @ w_t [Cin, D] + b2 [1, D]."""
    B, L, Cin = x.shape
    D = w_t.shape[-1]
    N = B * L
    tm_eff, n_pad = _row_tile(N, tm)
    x2 = _pad_rows(x.reshape(N, Cin), n_pad)

    out = pl.pallas_call(
        linear_kernel,
        out_shape=jax.ShapeDtypeStruct((n_pad, D), x.dtype),
        grid_spec=pltpu.PrefetchScalarGridSpec(
            num_scalar_prefetch=0,
            grid=(n_pad // tm_eff,),
            in_specs=[pl.BlockSpec((tm_eff, Cin), lambda i: (i, 0)),
                      pl.BlockSpec((Cin, D), lambda i: (0, 0)),
                      pl.BlockSpec((1, D), lambda i: (0, 0))],
            out_specs=pl.BlockSpec((tm_eff, D), lambda i: (i, 0))),
        compiler_params=pltpu.CompilerParams(
            dimension_semantics=("parallel",),
            vmem_limit_bytes=_vmem_limit(
                2 * tm_eff * (Cin + D) * 4 + Cin * D * 4 + D * 4)),
    )(x2, w_t, b2)

    if n_pad != N:
        out = out[:N]
    return out.reshape(B, L, D)


# --------------------------------------------------------------------------- #
# parameter preparation (called ONCE at init, not per forward)
# --------------------------------------------------------------------------- #
def prepare_params(raw):
    """Raw torch-layout weights -> kernel-friendly layouts (transpose + bf16)."""
    D = raw["pos_embed"].shape[-1]
    layers = []
    for lyr in raw["layers"]:
        layers.append(dict(
            w_cond_t=jnp.asarray(lyr["w_cond"].T, jnp.float32),        # (Cin, D)
            b_cond=lyr["b_cond"].reshape(1, D).astype(jnp.float32),
            block=(lyr["norm_w"].reshape(1, D).astype(jnp.float32),    # RMSNorm weight
                   jnp.asarray(lyr["w_mixer"].T, jnp.bfloat16),        # (in, out), bf16
                   lyr["b_mixer"].reshape(1, D).astype(jnp.float32)),
        ))
    return dict(pos_embed=raw["pos_embed"].astype(jnp.float32),
                layers=layers,
                norm_f_w=raw["norm_f_w"].reshape(1, D).astype(jnp.float32))


# --------------------------------------------------------------------------- #
# GambaFormer forward
# --------------------------------------------------------------------------- #
def gambaformer_forward(img_cond, params, *, gs_num, token_pnum=1, mod=None, tm=256):
    """img_cond: [N, L, Cin].  Returns {'feats': [N, gs_num, D]}.
    `mod` is accepted for API parity but unused (matches the reference module)."""
    del mod
    N, L, _ = img_cond.shape
    D = params["pos_embed"].shape[-1]
    assert gs_num % token_pnum == 0

    hidden = jnp.broadcast_to(params["pos_embed"][None], (N, gs_num, D))
    residual = None
    tok_plen = gs_num // token_pnum
    part_len = L + tok_plen

    for layer in params["layers"]:
        cond = linear_forward(img_cond, layer["w_cond_t"], layer["b_cond"], tm=tm)

        if residual is None:
            parts = []
            for idx in range(token_pnum):
                parts += [cond, hidden[:, idx * tok_plen:(idx + 1) * tok_plen]]
            hidden = jnp.concatenate(parts, axis=1)
        else:
            hp, rp = [], []
            for idx in range(token_pnum):
                hp.append(hidden[:, idx * part_len:(idx + 1) * part_len][:, L:])
                rp.append(residual[:, idx * part_len:(idx + 1) * part_len][:, L:])
            hidden = jnp.concatenate(hp, axis=1)
            residual = jnp.concatenate(rp, axis=1)
            hp, rp = [], []
            zeros_cond = jnp.zeros_like(cond)
            for idx in range(token_pnum):
                hp += [cond, hidden[:, idx * tok_plen:(idx + 1) * tok_plen]]
                rp += [zeros_cond, residual[:, idx * tok_plen:(idx + 1) * tok_plen]]
            hidden = jnp.concatenate(hp, axis=1)
            residual = jnp.concatenate(rp, axis=1)

        hidden, residual = block_forward(hidden, residual, layer["block"], tm=tm)

    hidden = final_add_norm(hidden, residual, params["norm_f_w"], tm=tm)

    parts = []
    for idx in range(token_pnum):
        parts.append(hidden[:, idx * part_len:(idx + 1) * part_len][:, L:])
    feats = jnp.concatenate(parts, axis=1)
    return {"feats": feats}


# --------------------------------------------------------------------------- #
# pure-JAX reference (f32 throughout), mirrors the torch module math
# --------------------------------------------------------------------------- #
def _rms_norm_ref(x, w):
    ms = jnp.mean(x * x, axis=-1, keepdims=True)
    return x * jax.lax.rsqrt(ms + EPS) * w


def reference_gambaformer(img_cond, raw, *, gs_num, token_pnum=1):
    N, L, _ = img_cond.shape
    D = raw["pos_embed"].shape[-1]
    hidden = jnp.broadcast_to(raw["pos_embed"][None], (N, gs_num, D))
    residual = None
    tok_plen = gs_num // token_pnum
    part_len = L + tok_plen

    for lyr in raw["layers"]:
        cond = img_cond @ lyr["w_cond"].T + lyr["b_cond"]
        if residual is None:
            parts = []
            for idx in range(token_pnum):
                parts += [cond, hidden[:, idx * tok_plen:(idx + 1) * tok_plen]]
            hidden = jnp.concatenate(parts, axis=1)
        else:
            hp, rp = [], []
            for idx in range(token_pnum):
                hp.append(hidden[:, idx * part_len:(idx + 1) * part_len][:, L:])
                rp.append(residual[:, idx * part_len:(idx + 1) * part_len][:, L:])
            hidden = jnp.concatenate(hp, axis=1)
            residual = jnp.concatenate(rp, axis=1)
            hp, rp = [], []
            for idx in range(token_pnum):
                hp += [cond, hidden[:, idx * tok_plen:(idx + 1) * tok_plen]]
                rp += [jnp.zeros_like(cond), residual[:, idx * tok_plen:(idx + 1) * tok_plen]]
            hidden = jnp.concatenate(hp, axis=1)
            residual = jnp.concatenate(rp, axis=1)
        # Block: fused add + RMSNorm (prenorm) + mixer stand-in
        resid_new = hidden + (residual if residual is not None else 0.0)
        normed = _rms_norm_ref(resid_new.astype(jnp.float32), lyr["norm_w"])
        hidden = normed @ lyr["w_mixer"].T + lyr["b_mixer"]
        residual = resid_new.astype(jnp.float32)

    resid = hidden + residual if residual is not None else hidden
    hidden = _rms_norm_ref(resid.astype(jnp.float32), raw["norm_f_w"])

    parts = []
    for idx in range(token_pnum):
        parts.append(hidden[:, idx * part_len:(idx + 1) * part_len][:, L:])
    return jnp.concatenate(parts, axis=1)


# --------------------------------------------------------------------------- #
if __name__ == "__main__":
    key = jax.random.PRNGKey(0)
    ks = jax.random.split(key, 8)

    # Small shapes consistent with the module; D lane-dense (multiple of 128).
    N, L, Cd = 2, 8, 64            # batch, cond length, image_feat_dim
    D, gs_num, num_layers = 128, 16, 2

    img_cond = jax.random.normal(ks[0], (N, L, Cd), dtype=jnp.float32)
    pos_embed = jax.random.normal(ks[1], (gs_num, D), dtype=jnp.float32) * (1.0 / D) ** 0.5

    layers = []
    for i in range(num_layers):
        k = jax.random.split(ks[2 + i], 3)
        layers.append(dict(
            w_cond=jax.random.normal(k[0], (D, Cd), dtype=jnp.float32) * 0.02,
            b_cond=jnp.zeros((D,), dtype=jnp.float32),
            norm_w=jnp.ones((D,), dtype=jnp.float32),
            w_mixer=jax.random.normal(k[1], (D, D), dtype=jnp.float32) * 0.02,
            b_mixer=jax.random.normal(k[2], (D,), dtype=jnp.float32) * 0.01,
        ))
    raw = dict(pos_embed=pos_embed, layers=layers,
               norm_f_w=jnp.ones((D,), dtype=jnp.float32))

    # Weight transpose + bf16 cast happen ONCE here (init), not per forward call.
    params = prepare_params(raw)

    # 1) default token_pnum=1
    out = gambaformer_forward(img_cond, params, gs_num=gs_num, token_pnum=1)
    feats = out["feats"]
    jax.block_until_ready(feats)
    ref = reference_gambaformer(img_cond, raw, gs_num=gs_num, token_pnum=1)
    assert feats.shape == (N, gs_num, D)
    assert jnp.allclose(feats, ref, atol=3e-2, rtol=3e-2), \
        float(jnp.max(jnp.abs(feats - ref)))

    # 2) token_pnum=2 exercises the interleave / de-interleave paths
    out2 = gambaformer_forward(img_cond, params, gs_num=gs_num, token_pnum=2)
    jax.block_until_ready(out2["feats"])
    ref2 = reference_gambaformer(img_cond, raw, gs_num=gs_num, token_pnum=2)
    assert jnp.allclose(out2["feats"], ref2, atol=3e-2, rtol=3e-2), \
        float(jnp.max(jnp.abs(out2["feats"] - ref2)))

    print("KERNEL_OK")
</pallas_src>

<mosaic_0001>
module attributes {stable_mosaic.version = 11 : i64} {
  func.func @linear_kernel(%arg0: i32, %arg1: memref<16x64xf32, #tpu.memory_space<vmem>>, %arg2: memref<64x128xf32, #tpu.memory_space<vmem>>, %arg3: memref<1x128xf32, #tpu.memory_space<vmem>>, %arg4: memref<16x128xf32, #tpu.memory_space<vmem>>) attributes {dimension_semantics = [#tpu.dimension_semantics<parallel>], iteration_bounds = array<i64: 1>, scalar_prefetch = 0 : i64, scratch_operands = 0 : i64, tpu.core_type = #tpu.core_type<tc>, window_params = [{transform_indices = @transform_0, window_bounds = array<i64: 16, 64>}, {pipeline_mode = #tpu.pipeline_mode<synchronous>, transform_indices = @transform_1, window_bounds = array<i64: 64, 128>}, {pipeline_mode = #tpu.pipeline_mode<synchronous>, transform_indices = @transform_2, window_bounds = array<i64: 1, 128>}, {transform_indices = @transform_3, window_bounds = array<i64: 16, 128>}]} {
    %c0 = arith.constant 0 : index
    %c0_0 = arith.constant 0 : index
    %0 = vector.load %arg1[%c0, %c0_0] : memref<16x64xf32, #tpu.memory_space<vmem>>, vector<16x64xf32>
    %c0_1 = arith.constant 0 : index
    %c0_2 = arith.constant 0 : index
    %1 = vector.load %arg2[%c0_1, %c0_2] : memref<64x128xf32, #tpu.memory_space<vmem>>, vector<64x128xf32>
    %cst = arith.constant dense<0.000000e+00> : vector<16x128xf32>
    %2 = tpu.matmul %0, %1, %cst {dimension_numbers = #tpu.dot_dimension_numbers<[1], [0], [0], [1], [0, 0, 1, 1], [], []>} : vector<16x64xf32>, vector<64x128xf32>, vector<16x128xf32> -> vector<16x128xf32>
    %c0_3 = arith.constant 0 : index
    %c0_4 = arith.constant 0 : index
    %3 = vector.load %arg3[%c0_3, %c0_4] : memref<1x128xf32, #tpu.memory_space<vmem>>, vector<1x128xf32>
    %4 = vector.broadcast %3 : vector<1x128xf32> to vector<16x128xf32>
    %5 = arith.addf %2, %4 : vector<16x128xf32>
    %c0_5 = arith.constant 0 : index
    %c0_6 = arith.constant 0 : index
    %6 = vector.load %arg4[%c0_5, %c0_6] : memref<16x128xf32, #tpu.memory_space<vmem>>, vector<16x128xf32>
    tpu.vector_store %arg4[%c0_5, %c0_6], %5 {strides = array<i32>} : memref<16x128xf32, #tpu.memory_space<vmem>>, vector<16x128xf32>,
    return
  }
  func.func @transform_0(%arg0: i32) -> (i32, i32) {
    %c0_i32 = arith.constant 0 : i32
    %c0_i32_0 = arith.constant 0 : i32
    return %arg0, %c0_i32 : i32, i32
  }
  func.func @transform_1(%arg0: i32) -> (i32, i32) {
    %c0_i32 = arith.constant 0 : i32
    %c0_i32_0 = arith.constant 0 : i32
    %c0_i32_1 = arith.constant 0 : i32
    return %c0_i32, %c0_i32_0 : i32, i32
  }
  func.func @transform_2(%arg0: i32) -> (i32, i32) {
    %c0_i32 = arith.constant 0 : i32
    %c0_i32_0 = arith.constant 0 : i32
    %c0_i32_1 = arith.constant 0 : i32
    return %c0_i32, %c0_i32_0 : i32, i32
  }
  func.func @transform_3(%arg0: i32) -> (i32, i32) {
    %c0_i32 = arith.constant 0 : i32
    %c0_i32_0 = arith.constant 0 : i32
    return %arg0, %c0_i32 : i32, i32
  }
}

</mosaic_0001>

<llo_original>
// kernel: tpu_custom_call.1
$region0: #{tpu_custom_call.1}
  #allocation0 [shape = 'u32[]', space=smem, size = 0x4, offset = 0x4, fixed_abs, tag = 'smem constant byte address 0x4 - core index']
  #allocation1 [shape = 'u32[72,128]{1,0:T(1,128)}', space=vmem, size = 0x9000, scoped, tag = 'internal scratch']
  %s0 = inlined_call_operand.hbm [shape: f32[16,64], index: 0, kind: input, shape index: {}]
  %s1 = inlined_call_operand.hbm [shape: f32[64,128], index: 1, kind: input, shape index: {}]
  %s2 = inlined_call_operand.vmem [shape: f32[1,128], index: 2, kind: input, shape index: {}]
  %s3 = inlined_call_operand.hbm [shape: f32[16,128], index: 3, kind: output, shape index: {}]
  %s4 = sld [smem:[#allocation0]]
  $region30: #{tpu_custom_call.1} parent=0
    _
  %s6 = ssub.s32 1, %s4
  %s7 = scalar_select 0, %s6, %s4
  $region1: #{tpu_custom_call.1} parent=0
    #allocation2 [shape = 'u8[8192]{0}', space=vmem, size = 0x2000, scoped, tag = 'input window, operand 0, single buffered']
    #allocation3 [shape = 's32[1]{0}', space=sflag, size = 0x4, scoped, tag = 'scoped memory for tpu_custom_call.1']
    #allocation4 [shape = 's32[1]{0}', space=sflag, size = 0x4, scoped, tag = 'scoped memory for tpu_custom_call.1']
    #allocation5 [shape = 'u8[32768]{0}', space=vmem, size = 0x8000, scoped, tag = 'input window, operand 1, single buffered']
    #allocation6 [shape = 's32[1]{0}', space=sflag, size = 0x4, scoped, tag = 'scoped memory for tpu_custom_call.1']
    #allocation7 [shape = 'u8[8192]{0}', space=vmem, size = 0x2000, scoped, tag = 'output window, operand 0, single buffered']
    %8 = vsyncpa [#allocation3], 0
    %9 = vsyncpa [#allocation6], 0
    %10 = vsyncpa [#allocation4], 0
    // Predicated region
    $region2: #{tpu_custom_call.1} parent=1 // pred_check
      _
    $region3: #{tpu_custom_call.1} parent=1 // pred_check_branch
      %12 = sbr.rel (0) target = $region5
    $region4: #{tpu_custom_call.1} parent=1 // pred_region
      %14 = vsyncadd [#allocation3], 0
      %s15 = sshll.u32 %s0, 4
      %s16 = int_to_ptr.hbm [resolvable:$true] %s15
      %s17 = sshll.u32 [#allocation2], 4
      %s18 = int_to_ptr.vmem [resolvable:$true] %s17
      %23 = dma.hbm_to_vmem [thread:$0]  %s16, 256, %s18, [#allocation3], 128, 128, 8
    $region5: #{tpu_custom_call.1} parent=1 // pred_fallthru
      _
    // Predicated region
    $region6: #{tpu_custom_call.1} parent=1 // pred_check
      _
    $region7: #{tpu_custom_call.1} parent=1 // pred_check_branch
      %25 = sbr.rel (0) target = $region9
    $region8: #{tpu_custom_call.1} parent=1 // pred_region
      %27 = vsyncadd [#allocation6], 0
      %s28 = sshll.u32 %s1, 4
      %s29 = int_to_ptr.hbm [resolvable:$true] %s28
      %s30 = sshll.u32 [#allocation5], 4
      %s31 = int_to_ptr.vmem [resolvable:$true] %s30
      %36 = dma.hbm_to_vmem [thread:$0]  %s29, 1024, %s31, [#allocation6], 128, 128, 8
    $region9: #{tpu_custom_call.1} parent=1 // pred_fallthru
      _
    // Predicated region
    $region10: #{tpu_custom_call.1} parent=1 // pred_check
      _
    $region11: #{tpu_custom_call.1} parent=1 // pred_check_branch
      %38 = sbr.rel (0) target = $region13
    $region12: #{tpu_custom_call.1} parent=1 // pred_region
      _
    $region13: #{tpu_custom_call.1} parent=1 // pred_fallthru
      _
    // Predicated region
    $region14: #{tpu_custom_call.1} parent=1 // pred_check
      _
    $region15: #{tpu_custom_call.1} parent=1 // pred_check_branch
      %40 = sbr.rel (0) target = $region17
    $region16: #{tpu_custom_call.1} parent=1 // pred_region
      %42 = dma.done [#allocation3], 256
    $region17: #{tpu_custom_call.1} parent=1 // pred_fallthru
      _
    // Predicated region
    $region18: #{tpu_custom_call.1} parent=1 // pred_check
      _
    $region19: #{tpu_custom_call.1} parent=1 // pred_check_branch
      %44 = sbr.rel (0) target = $region21
    $region20: #{tpu_custom_call.1} parent=1 // pred_region
      %46 = dma.done [#allocation6], 1024
    $region21: #{tpu_custom_call.1} parent=1 // pred_fallthru
      _
    %v47 = vld [vmem:[#allocation2] sm:$0xff]
    %v48 = vld [vmem:[#allocation2 + $0x8] sm:$0xff]
    %v49 = vld [vmem:[#allocation5] sm:$0xff]
    %v50 = vld [vmem:[#allocation5 + $0x8] sm:$0xff]
    %v51 = vld [vmem:[#allocation5 + $0x10] sm:$0xff]
    %v52 = vld [vmem:[#allocation5 + $0x18] sm:$0xff]
    %v53 = vld [vmem:[#allocation5 + $0x20] sm:$0xff]
    %v54 = vld [vmem:[#allocation5 + $0x28] sm:$0xff]
    %v55 = vld [vmem:[#allocation5 + $0x30] sm:$0xff]
    %v56 = vld [vmem:[#allocation5 + $0x38] sm:$0xff]
    %v57 = vld [vmem:[%s2] sm:$0x1]
    %v59 = vperm.slane %v57, 0
    %vm61 = vcmask 523264
    %v63 = vsel %vm61, %v47, 0
    %v66 = vsel %vm61, %v48, 0
    %68 = vmatpush.msra.mxu0 0.0
    %69 = vmatpush.msra.mxu0 0.0
    %70 = vmatpush.msra.mxu0 0.0
    %71 = vmatpush.msra.mxu0 0.0
    %72 = vmatpush.msra.mxu0 0.0
    %73 = vmatpush.msra.mxu0 0.0
    %74 = vmatpush.msra.mxu0 0.0
    %75 = vmatpush.msra.mxu0 0.0
    %76 = vmatpush.msra.mxu0 %v56
    %77 = vmatpush.msra.mxu0 %v55
    %78 = vmatpush.msra.mxu0 %v54
    %79 = vmatpush.msra.mxu0 %v53
    %80 = vmatpush.msra.mxu0 %v52
    %81 = vmatpush.msra.mxu0 %v51
    %82 = vmatpush.msra.mxu0 %v50
    %83 = vmatpush.msra.mxu0 %v49
    %84 = vmatmul.f32.gmra.mxu0 %v63
    %v85 = vpop.f32.mrf.mxu0
    %v86 = vadd.f32 %v59, %v85
    %87 = vmatmul.f32.gmra.mxu0 %v66
    %v88 = vpop.f32.mrf.mxu0
    %v89 = vadd.f32 %v59, %v88
    %90 = vdwg.mxu0
    %91 = vst [vmem:[#allocation7] sm:$0xff] %v86
    %92 = vst [vmem:[#allocation7 + $0x8] sm:$0xff] %v89
    // Predicated region
    $region22: #{tpu_custom_call.1} parent=1 // pred_check
      _
    $region23: #{tpu_custom_call.1} parent=1 // pred_check_branch
      %94 = sbr.rel (0) target = $region25
    $region24: #{tpu_custom_call.1} parent=1 // pred_region
      %96 = vsyncadd [#allocation4], 0
      %s97 = sshll.u32 [#allocation7], 4
      %s98 = int_to_ptr.vmem [resolvable:$true] %s97
      %s99 = sshll.u32 %s3, 4
      %s100 = int_to_ptr.hbm [resolvable:$true] %s99
      %105 = dma.vmem_to_hbm [thread:$0]  %s98, 256, %s100, [#allocation4], 128, 128, 8
    $region25: #{tpu_custom_call.1} parent=1 // pred_fallthru
      _
    // Predicated region
    $region26: #{tpu_custom_call.1} parent=1 // pred_check
      _
    $region27: #{tpu_custom_call.1} parent=1 // pred_check_branch
      %107 = sbr.rel (0) target = $region29
    $region28: #{tpu_custom_call.1} parent=1 // pred_region
      %109 = dma.done [#allocation4], 256
    $region29: #{tpu_custom_call.1} parent=1 // pred_fallthru
      _
    %110 = vsyncpa [#allocation3], 1
    %111 = vsyncpa [#allocation6], 1
    %112 = vsyncpa [#allocation4], 1

</llo_original>
